<compile_context>
chip_gen: v6e
topology: v6e:2x2x1
jax: 0.10.0
libtpu: 0.0.40
codegen_flags: <defaults>
</compile_context>

<pallas_src>
import jax
import jax.numpy as jnp
from jax.experimental import pallas as pl
from jax.experimental.pallas import tpu as pltpu

n_hidden_1 = 128
n_hidden_2 = 128
n_hidden_3 = 128           # parity with the module; layer3 is dead code in forward
num_classes = 10
OUT_PAD = 128              # lane-dense padded output width (>= num_classes)


def _round_up(x, m):
    return (x + m - 1) // m * m


def _choose_tb(B, tb):
    """Pick the batch tile. Small batches: one step. Large batches: a multiple
    of 128, capped at `tb`, sized so the grid has >=2 steps (dual-TC on v7x)."""
    if B <= 256:
        return _round_up(B, 8)
    b128 = _round_up(B, 128)
    half = max(128, (b128 // 2) // 128 * 128)   # >= 2 grid steps
    return min(tb, half)


def fcnn_kernel(x_ref, w1_ref, b1_ref, w2_ref, b2_ref, w4_ref, b4_ref, o_ref):
    # x arrives in native f32; cast to bf16 in-kernel (VPU, hidden under HBM time).
    x = x_ref[...].astype(jnp.bfloat16)
    # layer1 + sigmoid: bf16 MXU matmul, f32 accumulate; bias/sigmoid in f32
    # (v5e has no bf16 VPU/EUP, so elementwise stays f32 on every generation).
    z1 = jnp.dot(x, w1_ref[...], preferred_element_type=jnp.float32) + b1_ref[...]
    h1 = jax.nn.sigmoid(z1)
    # layer2 + sigmoid
    z2 = jnp.dot(h1.astype(jnp.bfloat16), w2_ref[...],
                 preferred_element_type=jnp.float32) + b2_ref[...]
    h2 = jax.nn.sigmoid(z2)
    # layer4 applied to h2 (matches the original forward, which ignores h3).
    out = jnp.dot(h2.astype(jnp.bfloat16), w4_ref[...],
                  preferred_element_type=jnp.float32) + b4_ref[...]
    o_ref[...] = out.astype(o_ref.dtype)          # bf16 writeback (lane-dense, unmasked)


def fcnn_forward(x, params, *, tb=1024):
    """x: (B, input_dim) f32. params: transposed f32 weights (in, out), biases (1, out).
    Returns (B, num_classes) bf16 logits (f32 accumulation inside the kernel)."""
    B, input_dim = x.shape

    # ---- pack parameters: bf16 weights for the MXU, f32 biases, lane-dense layer4 ----
    w1 = params["w1"].astype(jnp.bfloat16)
    w2 = params["w2"].astype(jnp.bfloat16)
    w4 = jnp.zeros((n_hidden_2, OUT_PAD), jnp.bfloat16)
    w4 = w4.at[:, :num_classes].set(params["w4"].astype(jnp.bfloat16))
    b1 = params["b1"].astype(jnp.float32)
    b2 = params["b2"].astype(jnp.float32)
    b4 = jnp.zeros((1, OUT_PAD), jnp.float32)
    b4 = b4.at[:, :num_classes].set(params["b4"].astype(jnp.float32))

    # ---- batch tiling: no dtype pre-pass over x; only pad trailing rows if needed ----
    TB = _choose_tb(B, tb)
    B_pad = _round_up(B, TB)
    x_in = x
    if B_pad != B:
        x_in = jnp.pad(x, ((0, B_pad - B), (0, 0)))   # zero rows; sliced off below

    grid = (B_pad // TB,)
    resident = lambda i: (0, 0)                        # weights/biases resident across grid

    # ---- scheduler hint: real byte traffic after the dtype changes ----
    flops = 2 * B_pad * (input_dim * n_hidden_1 + n_hidden_1 * n_hidden_2
                         + n_hidden_2 * OUT_PAD)
    bytes_accessed = (B_pad * input_dim * 4            # x read (f32)
                      + B_pad * OUT_PAD * 2            # out write (bf16)
                      + 2 * (input_dim * n_hidden_1 + n_hidden_1 * n_hidden_2
                             + n_hidden_2 * OUT_PAD)   # bf16 weights
                      + 4 * (n_hidden_1 + n_hidden_2 + OUT_PAD))  # f32 biases
    cost = pl.CostEstimate(flops=flops,
                           transcendentals=B_pad * (n_hidden_1 + n_hidden_2),
                           bytes_accessed=bytes_accessed)

    # ---- VMEM budget: derived from the actual per-step footprint (tight, v7x-safe) ----
    vmem_bytes = (2 * TB * input_dim * 4               # double-buffered x tiles (f32)
                  + 2 * TB * OUT_PAD * 2               # double-buffered out tiles (bf16)
                  + 2 * 2 * (input_dim * n_hidden_1 + n_hidden_1 * n_hidden_2
                             + n_hidden_2 * OUT_PAD)   # weights (count as double-buffered)
                  + 2 * 4 * (n_hidden_1 + n_hidden_2 + OUT_PAD)      # biases
                  + 4 * TB * (n_hidden_1 + n_hidden_2 + OUT_PAD))    # f32 activation temps
    vmem_limit = int(min(max(2 * vmem_bytes, 4 * 1024 * 1024), 32 * 1024 * 1024))

    out_padded = pl.pallas_call(
        fcnn_kernel,
        out_shape=jax.ShapeDtypeStruct((B_pad, OUT_PAD), jnp.bfloat16),
        grid=grid,
        in_specs=[
            pl.BlockSpec((TB, input_dim), lambda i: (i, 0)),       # x tile (pipelined)
            pl.BlockSpec((input_dim, n_hidden_1), resident),       # w1
            pl.BlockSpec((1, n_hidden_1), resident),               # b1
            pl.BlockSpec((n_hidden_1, n_hidden_2), resident),      # w2
            pl.BlockSpec((1, n_hidden_2), resident),               # b2
            pl.BlockSpec((n_hidden_2, OUT_PAD), resident),         # w4 (lane-padded)
            pl.BlockSpec((1, OUT_PAD), resident),                  # b4 (lane-padded)
        ],
        out_specs=pl.BlockSpec((TB, OUT_PAD), lambda i: (i, 0)),
        compiler_params=pltpu.CompilerParams(
            dimension_semantics=("parallel",),   # dual-TC sharding on v7x (>=2 steps)
            vmem_limit_bytes=vmem_limit,
        ),
        cost_estimate=cost,
    )(x_in, w1, b1, w2, b2, w4, b4)

    return out_padded[:B, :num_classes]


def init_params(key, input_dim):
    """Deterministic init mimicking nn.Linear (uniform +/- 1/sqrt(fan_in)).
    Weights stored transposed: (in_features, out_features). Biases as (1, out)."""
    def linear(k, fan_in, fan_out):
        kw, kb = jax.random.split(k)
        bound = 1.0 / jnp.sqrt(fan_in)
        w = jax.random.uniform(kw, (fan_in, fan_out), jnp.float32, -bound, bound)
        b = jax.random.uniform(kb, (1, fan_out), jnp.float32, -bound, bound)
        return w, b

    k1, k2, k3, k4 = jax.random.split(key, 4)
    w1, b1 = linear(k1, input_dim, n_hidden_1)
    w2, b2 = linear(k2, n_hidden_1, n_hidden_2)
    _w3, _b3 = linear(k3, n_hidden_2, n_hidden_3)  # present in module, unused in forward
    w4, b4 = linear(k4, n_hidden_3, num_classes)
    return {"w1": w1, "b1": b1, "w2": w2, "b2": b2, "w4": w4, "b4": b4}


def fcnn_reference(x, p):
    """Pure f32 reference matching the PyTorch forward (p=None path)."""
    h1 = jax.nn.sigmoid(x @ p["w1"] + p["b1"])
    h2 = jax.nn.sigmoid(h1 @ p["w2"] + p["b2"])
    return h2 @ p["w4"] + p["b4"]


if __name__ == "__main__":
    key = jax.random.PRNGKey(0)
    kx, kp = jax.random.split(key)

    batch, input_dim = 8, 64
    x = jax.random.normal(kx, (batch, input_dim), jnp.float32)
    params = init_params(kp, input_dim)

    out = fcnn_forward(x, params)
    out = jax.block_until_ready(out)

    ref = fcnn_reference(x, params)
    assert out.shape == (batch, num_classes)
    # bf16 MXU inputs + bf16 writeback (f32 accumulation) => loose-ish tolerance.
    diff = jnp.max(jnp.abs(out.astype(jnp.float32) - ref))
    assert jnp.allclose(out.astype(jnp.float32), ref, atol=2e-2, rtol=2e-2), float(diff)

    print("KERNEL_OK")
</pallas_src>

<mosaic_0001>
module attributes {stable_mosaic.version = 11 : i64} {
  func.func @fcnn_kernel(%arg0: i32, %arg1: memref<8x64xf32, #tpu.memory_space<vmem>>, %arg2: memref<64x128xbf16, #tpu.memory_space<vmem>>, %arg3: memref<1x128xf32, #tpu.memory_space<vmem>>, %arg4: memref<128x128xbf16, #tpu.memory_space<vmem>>, %arg5: memref<1x128xf32, #tpu.memory_space<vmem>>, %arg6: memref<128x128xbf16, #tpu.memory_space<vmem>>, %arg7: memref<1x128xf32, #tpu.memory_space<vmem>>, %arg8: memref<8x128xbf16, #tpu.memory_space<vmem>>) attributes {dimension_semantics = [#tpu.dimension_semantics<parallel>], iteration_bounds = array<i64: 1>, scalar_prefetch = 0 : i64, scratch_operands = 0 : i64, tpu.core_type = #tpu.core_type<tc>, window_params = [{transform_indices = @transform_0, window_bounds = array<i64: 8, 64>}, {pipeline_mode = #tpu.pipeline_mode<synchronous>, transform_indices = @transform_1, window_bounds = array<i64: 64, 128>}, {pipeline_mode = #tpu.pipeline_mode<synchronous>, transform_indices = @transform_2, window_bounds = array<i64: 1, 128>}, {pipeline_mode = #tpu.pipeline_mode<synchronous>, transform_indices = @transform_3, window_bounds = array<i64: 128, 128>}, {pipeline_mode = #tpu.pipeline_mode<synchronous>, transform_indices = @transform_4, window_bounds = array<i64: 1, 128>}, {pipeline_mode = #tpu.pipeline_mode<synchronous>, transform_indices = @transform_5, window_bounds = array<i64: 128, 128>}, {pipeline_mode = #tpu.pipeline_mode<synchronous>, transform_indices = @transform_6, window_bounds = array<i64: 1, 128>}, {transform_indices = @transform_7, window_bounds = array<i64: 8, 128>}]} {
    %c0 = arith.constant 0 : index
    %c0_0 = arith.constant 0 : index
    %0 = vector.load %arg1[%c0, %c0_0] : memref<8x64xf32, #tpu.memory_space<vmem>>, vector<8x64xf32>
    %1 = arith.truncf %0 : vector<8x64xf32> to vector<8x64xbf16>
    %c0_1 = arith.constant 0 : index
    %c0_2 = arith.constant 0 : index
    %2 = vector.load %arg2[%c0_1, %c0_2] : memref<64x128xbf16, #tpu.memory_space<vmem>>, vector<64x128xbf16>
    %cst = arith.constant dense<0.000000e+00> : vector<8x128xf32>
    %3 = tpu.matmul %1, %2, %cst {dimension_numbers = #tpu.dot_dimension_numbers<[1], [0], [0], [1], [0, 0, 1, 1], [], []>} : vector<8x64xbf16>, vector<64x128xbf16>, vector<8x128xf32> -> vector<8x128xf32>
    %c0_3 = arith.constant 0 : index
    %c0_4 = arith.constant 0 : index
    %4 = vector.load %arg3[%c0_3, %c0_4] : memref<1x128xf32, #tpu.memory_space<vmem>>, vector<1x128xf32>
    %5 = vector.broadcast %4 : vector<1x128xf32> to vector<8x128xf32>
    %6 = arith.addf %3, %5 : vector<8x128xf32>
    %7 = arith.negf %6 : vector<8x128xf32>
    %8 = math.exp %7 : vector<8x128xf32>
    %cst_5 = arith.constant 1.000000e+00 : f32
    %9 = vector.broadcast %cst_5 : f32 to vector<8x128xf32>
    %10 = arith.addf %9, %8 : vector<8x128xf32>
    %11 = arith.divf %9, %10 : vector<8x128xf32>
    %12 = arith.truncf %11 : vector<8x128xf32> to vector<8x128xbf16>
    %c0_6 = arith.constant 0 : index
    %c0_7 = arith.constant 0 : index
    %13 = vector.load %arg4[%c0_6, %c0_7] : memref<128x128xbf16, #tpu.memory_space<vmem>>, vector<128x128xbf16>
    %cst_8 = arith.constant dense<0.000000e+00> : vector<8x128xf32>
    %14 = tpu.matmul %12, %13, %cst_8 {dimension_numbers = #tpu.dot_dimension_numbers<[1], [0], [0], [1], [0, 0, 1, 1], [], []>} : vector<8x128xbf16>, vector<128x128xbf16>, vector<8x128xf32> -> vector<8x128xf32>
    %c0_9 = arith.constant 0 : index
    %c0_10 = arith.constant 0 : index
    %15 = vector.load %arg5[%c0_9, %c0_10] : memref<1x128xf32, #tpu.memory_space<vmem>>, vector<1x128xf32>
    %16 = vector.broadcast %15 : vector<1x128xf32> to vector<8x128xf32>
    %17 = arith.addf %14, %16 : vector<8x128xf32>
    %18 = arith.negf %17 : vector<8x128xf32>
    %19 = math.exp %18 : vector<8x128xf32>
    %cst_11 = arith.constant 1.000000e+00 : f32
    %20 = vector.broadcast %cst_11 : f32 to vector<8x128xf32>
    %21 = arith.addf %20, %19 : vector<8x128xf32>
    %22 = arith.divf %20, %21 : vector<8x128xf32>
    %23 = arith.truncf %22 : vector<8x128xf32> to vector<8x128xbf16>
    %c0_12 = arith.constant 0 : index
    %c0_13 = arith.constant 0 : index
    %24 = vector.load %arg6[%c0_12, %c0_13] : memref<128x128xbf16, #tpu.memory_space<vmem>>, vector<128x128xbf16>
    %cst_14 = arith.constant dense<0.000000e+00> : vector<8x128xf32>
    %25 = tpu.matmul %23, %24, %cst_14 {dimension_numbers = #tpu.dot_dimension_numbers<[1], [0], [0], [1], [0, 0, 1, 1], [], []>} : vector<8x128xbf16>, vector<128x128xbf16>, vector<8x128xf32> -> vector<8x128xf32>
    %c0_15 = arith.constant 0 : index
    %c0_16 = arith.constant 0 : index
    %26 = vector.load %arg7[%c0_15, %c0_16] : memref<1x128xf32, #tpu.memory_space<vmem>>, vector<1x128xf32>
    %27 = vector.broadcast %26 : vector<1x128xf32> to vector<8x128xf32>
    %28 = arith.addf %25, %27 : vector<8x128xf32>
    %29 = arith.truncf %28 : vector<8x128xf32> to vector<8x128xbf16>
    %c0_17 = arith.constant 0 : index
    %c0_18 = arith.constant 0 : index
    %30 = vector.load %arg8[%c0_17, %c0_18] : memref<8x128xbf16, #tpu.memory_space<vmem>>, vector<8x128xbf16>
    tpu.vector_store %arg8[%c0_17, %c0_18], %29 {strides = array<i32>} : memref<8x128xbf16, #tpu.memory_space<vmem>>, vector<8x128xbf16>,
    return
  }
  func.func @transform_0(%arg0: i32) -> (i32, i32) {
    %c0_i32 = arith.constant 0 : i32
    %c0_i32_0 = arith.constant 0 : i32
    return %arg0, %c0_i32 : i32, i32
  }
  func.func @transform_1(%arg0: i32) -> (i32, i32) {
    %c0_i32 = arith.constant 0 : i32
    %c0_i32_0 = arith.constant 0 : i32
    %c0_i32_1 = arith.constant 0 : i32
    return %c0_i32, %c0_i32_0 : i32, i32
  }
  func.func @transform_2(%arg0: i32) -> (i32, i32) {
    %c0_i32 = arith.constant 0 : i32
    %c0_i32_0 = arith.constant 0 : i32
    %c0_i32_1 = arith.constant 0 : i32
    return %c0_i32, %c0_i32_0 : i32, i32
  }
  func.func @transform_3(%arg0: i32) -> (i32, i32) {
    %c0_i32 = arith.constant 0 : i32
    %c0_i32_0 = arith.constant 0 : i32
    %c0_i32_1 = arith.constant 0 : i32
    return %c0_i32, %c0_i32_0 : i32, i32
  }
  func.func @transform_4(%arg0: i32) -> (i32, i32) {
    %c0_i32 = arith.constant 0 : i32
    %c0_i32_0 = arith.constant 0 : i32
    %c0_i32_1 = arith.constant 0 : i32
    return %c0_i32, %c0_i32_0 : i32, i32
  }
  func.func @transform_5(%arg0: i32) -> (i32, i32) {
    %c0_i32 = arith.constant 0 : i32
    %c0_i32_0 = arith.constant 0 : i32
    %c0_i32_1 = arith.constant 0 : i32
    return %c0_i32, %c0_i32_0 : i32, i32
  }
  func.func @transform_6(%arg0: i32) -> (i32, i32) {
    %c0_i32 = arith.constant 0 : i32
    %c0_i32_0 = arith.constant 0 : i32
    %c0_i32_1 = arith.constant 0 : i32
    return %c0_i32, %c0_i32_0 : i32, i32
  }
  func.func @transform_7(%arg0: i32) -> (i32, i32) {
    %c0_i32 = arith.constant 0 : i32
    %c0_i32_0 = arith.constant 0 : i32
    return %arg0, %c0_i32 : i32, i32
  }
}

</mosaic_0001>

<llo_original>
// kernel: tpu_custom_call.1
$region0: #{tpu_custom_call.1}
  #allocation0 [shape = 'u32[]', space=smem, size = 0x4, offset = 0x4, fixed_abs, tag = 'smem constant byte address 0x4 - core index']
  #allocation1 [shape = 'u32[144,128]{1,0:T(1,128)}', space=vmem, size = 0x12000, scoped, tag = 'internal scratch']
  %s0 = inlined_call_operand.hbm [shape: f32[8,64], index: 0, kind: input, shape index: {}]
  %s1 = inlined_call_operand.hbm [shape: bf16[64,128], index: 1, kind: input, shape index: {}]
  %s2 = inlined_call_operand.vmem [shape: f32[1,128], index: 2, kind: input, shape index: {}]
  %s3 = inlined_call_operand.hbm [shape: bf16[128,128], index: 3, kind: input, shape index: {}]
  %s4 = inlined_call_operand.vmem [shape: f32[1,128], index: 4, kind: input, shape index: {}]
  %s5 = inlined_call_operand.hbm [shape: bf16[128,128], index: 5, kind: input, shape index: {}]
  %s6 = inlined_call_operand.vmem [shape: f32[1,128], index: 6, kind: input, shape index: {}]
  %s7 = inlined_call_operand.hbm [shape: bf16[8,128], index: 7, kind: output, shape index: {}]
  %s8 = sld [smem:[#allocation0]]
  $region54: #{tpu_custom_call.1} parent=0
    _
  %s10 = ssub.s32 1, %s8
  %s11 = scalar_select 0, %s10, %s8
  $region1: #{tpu_custom_call.1} parent=0
    #allocation2 [shape = 'u8[4096]{0}', space=vmem, size = 0x1000, scoped, tag = 'input window, operand 0, single buffered']
    #allocation3 [shape = 's32[1]{0}', space=sflag, size = 0x4, scoped, tag = 'scoped memory for tpu_custom_call.1']
    #allocation4 [shape = 's32[1]{0}', space=sflag, size = 0x4, scoped, tag = 'scoped memory for tpu_custom_call.1']
    #allocation5 [shape = 'u8[16384]{0}', space=vmem, size = 0x4000, scoped, tag = 'input window, operand 1, single buffered']
    #allocation6 [shape = 's32[1]{0}', space=sflag, size = 0x4, scoped, tag = 'scoped memory for tpu_custom_call.1']
    #allocation7 [shape = 'u8[32768]{0}', space=vmem, size = 0x8000, scoped, tag = 'input window, operand 3, single buffered']
    #allocation8 [shape = 'u8[32768]{0}', space=vmem, size = 0x8000, scoped, tag = 'input window, operand 5, single buffered']
    #allocation9 [shape = 's32[1]{0}', space=sflag, size = 0x4, scoped, tag = 'scoped memory for tpu_custom_call.1']
    #allocation10 [shape = 'u8[2048]{0}', space=vmem, size = 0x800, scoped, tag = 'output window, operand 0, single buffered']
    %12 = vsyncpa [#allocation3], 0
    %13 = vsyncpa [#allocation6], 0
    %14 = vsyncpa [#allocation9], 0
    %15 = vsyncpa [#allocation4], 0
    // Predicated region
    $region2: #{tpu_custom_call.1} parent=1 // pred_check
      _
    $region3: #{tpu_custom_call.1} parent=1 // pred_check_branch
      %17 = sbr.rel (0) target = $region5
    $region4: #{tpu_custom_call.1} parent=1 // pred_region
      %s19 = ssub.s32 128, 128
      %20 = vsyncadd [#allocation3], %s19
      %s22 = sshll.u32 [#allocation2], 4
      %s23 = int_to_ptr.vmem [resolvable:$true] %s22
      %25 = dma.hbm_to_vmem [thread:$0]  %s0, 128, %s23, [#allocation3]
    $region5: #{tpu_custom_call.1} parent=1 // pred_fallthru
      _
    // Predicated region
    $region6: #{tpu_custom_call.1} parent=1 // pred_check
      _
    $region7: #{tpu_custom_call.1} parent=1 // pred_check_branch
      %27 = sbr.rel (0) target = $region9
    $region8: #{tpu_custom_call.1} parent=1 // pred_region
      %s29 = ssub.s32 512, 512
      %30 = vsyncadd [#allocation6], %s29
      %s31 = sshll.u32 [#allocation5], 4
      %s32 = int_to_ptr.vmem [resolvable:$true] %s31
      %37 = dma.hbm_to_vmem [thread:$0]  %s1, 512, %s32, [#allocation6], 64, 64, 4
    $region9: #{tpu_custom_call.1} parent=1 // pred_fallthru
      _
    // Predicated region
    $region10: #{tpu_custom_call.1} parent=1 // pred_check
      _
    $region11: #{tpu_custom_call.1} parent=1 // pred_check_branch
      %39 = sbr.rel (0) target = $region13
    $region12: #{tpu_custom_call.1} parent=1 // pred_region
      _
    $region13: #{tpu_custom_call.1} parent=1 // pred_fallthru
      _
    // Predicated region
    $region14: #{tpu_custom_call.1} parent=1 // pred_check
      _
    $region15: #{tpu_custom_call.1} parent=1 // pred_check_branch
      %41 = sbr.rel (0) target = $region17
    $region16: #{tpu_custom_call.1} parent=1 // pred_region
      %s43 = ssub.s32 1024, 1024
      %44 = vsyncadd [#allocation6], %s43
      %s45 = sshll.u32 [#allocation7], 4
      %s46 = int_to_ptr.vmem [resolvable:$true] %s45
      %51 = dma.hbm_to_vmem [thread:$0]  %s3, 1024, %s46, [#allocation6], 64, 64, 4
    $region17: #{tpu_custom_call.1} parent=1 // pred_fallthru
      _
    // Predicated region
    $region18: #{tpu_custom_call.1} parent=1 // pred_check
      _
    $region19: #{tpu_custom_call.1} parent=1 // pred_check_branch
      %53 = sbr.rel (0) target = $region21
    $region20: #{tpu_custom_call.1} parent=1 // pred_region
      _
    $region21: #{tpu_custom_call.1} parent=1 // pred_fallthru
      _
    // Predicated region
    $region22: #{tpu_custom_call.1} parent=1 // pred_check
      _
    $region23: #{tpu_custom_call.1} parent=1 // pred_check_branch
      %55 = sbr.rel (0) target = $region25
    $region24: #{tpu_custom_call.1} parent=1 // pred_region
      %s57 = ssub.s32 1024, 1024
      %58 = vsyncadd [#allocation9], %s57
      %s59 = sshll.u32 [#allocation8], 4
      %s60 = int_to_ptr.vmem [resolvable:$true] %s59
      %65 = dma.hbm_to_vmem [thread:$0]  %s5, 1024, %s60, [#allocation9], 64, 64, 4
    $region25: #{tpu_custom_call.1} parent=1 // pred_fallthru
      _
    // Predicated region
    $region26: #{tpu_custom_call.1} parent=1 // pred_check
      _
    $region27: #{tpu_custom_call.1} parent=1 // pred_check_branch
      %67 = sbr.rel (0) target = $region29
    $region28: #{tpu_custom_call.1} parent=1 // pred_region
      _
    $region29: #{tpu_custom_call.1} parent=1 // pred_fallthru
      _
    // Predicated region
    $region30: #{tpu_custom_call.1} parent=1 // pred_check
      _
    $region31: #{tpu_custom_call.1} parent=1 // pred_check_branch
      %69 = sbr.rel (0) target = $region33
    $region32: #{tpu_custom_call.1} parent=1 // pred_region
      %70 = dma.done [#allocation3], 128
    $region33: #{tpu_custom_call.1} parent=1 // pred_fallthru
      _
    // Predicated region
    $region34: #{tpu_custom_call.1} parent=1 // pred_check
      _
    $region35: #{tpu_custom_call.1} parent=1 // pred_check_branch
      %72 = sbr.rel (0) target = $region37
    $region36: #{tpu_custom_call.1} parent=1 // pred_region
      %73 = dma.done [#allocation6], 512
    $region37: #{tpu_custom_call.1} parent=1 // pred_fallthru
      _
    // Predicated region
    $region38: #{tpu_custom_call.1} parent=1 // pred_check
      _
    $region39: #{tpu_custom_call.1} parent=1 // pred_check_branch
      %75 = sbr.rel (0) target = $region41
    $region40: #{tpu_custom_call.1} parent=1 // pred_region
      %76 = dma.done [#allocation6], 1024
    $region41: #{tpu_custom_call.1} parent=1 // pred_fallthru
      _
    // Predicated region
    $region42: #{tpu_custom_call.1} parent=1 // pred_check
      _
    $region43: #{tpu_custom_call.1} parent=1 // pred_check_branch
      %78 = sbr.rel (0) target = $region45
    $region44: #{tpu_custom_call.1} parent=1 // pred_region
      %79 = dma.done [#allocation9], 1024
    $region45: #{tpu_custom_call.1} parent=1 // pred_fallthru
      _
    %v81 = vld [vmem:[#allocation2] sm:$0xff]
    %v82 = vpack.c.bf16 %v81, %v81
    %v83 = vld [vmem:[#allocation5] sm:$0xf]
    %v84 = vld [vmem:[#allocation5 + $0x4] sm:$0xf]
    %v85 = vld [vmem:[#allocation5 + $0x8] sm:$0xf]
    %v86 = vld [vmem:[#allocation5 + $0xc] sm:$0xf]
    %v87 = vld [vmem:[#allocation5 + $0x10] sm:$0xf]
    %v88 = vld [vmem:[#allocation5 + $0x14] sm:$0xf]
    %v89 = vld [vmem:[#allocation5 + $0x18] sm:$0xf]
    %v90 = vld [vmem:[#allocation5 + $0x1c] sm:$0xf]
    %v91 = vld [vmem:[%s2] sm:$0x1]
    %v93 = vlaneseq
    %v94 = vshrl.u32 %v93, 7
    %v95 = vsub.s32 0, %v94
    %v96 = vrot.slane %v91, %v95
    %v106 = vunpack.c.l.b16 %v83
    %v107 = vunpack.c.l.b16 %v84
    %v108 = vunpack.c.l.b16 %v85
    %v109 = vunpack.c.l.b16 %v86
    %v110 = vunpack.c.l.b16 %v87
    %v111 = vunpack.c.l.b16 %v88
    %v112 = vunpack.c.l.b16 %v89
    %v113 = vunpack.c.l.b16 %v90
    %v114 = vpack.c.b16 %v107, %v106
    %v115 = vpack.c.b16 %v109, %v108
    %v116 = vpack.c.b16 %v111, %v110
    %v117 = vpack.c.b16 %v113, %v112
    %vm122 = vcmask 523264
    %v124 = vsel %vm122, %v82, 0
    %126 = vmatprep.subr.bf16.mxu0 0
    %127 = vmatpush1.bf16.msra.mxu0 0
    %128 = vmatprep.subr.bf16.mxu0 0
    %129 = vmatpush1.bf16.msra.mxu0 0
    %130 = vmatprep.subr.bf16.mxu0 0
    %131 = vmatpush1.bf16.msra.mxu0 0
    %132 = vmatprep.subr.bf16.mxu0 0
    %133 = vmatpush1.bf16.msra.mxu0 0
    %134 = vmatprep.subr.bf16.mxu0 0
    %135 = vmatpush1.bf16.msra.mxu0 %v117
    %136 = vmatprep.subr.bf16.mxu0 0
    %137 = vmatpush1.bf16.msra.mxu0 %v116
    %138 = vmatprep.subr.bf16.mxu0 0
    %139 = vmatpush1.bf16.msra.mxu0 %v115
    %140 = vmatprep.subr.bf16.mxu0 0
    %141 = vmatpush1.bf16.msra.mxu0 %v114
    %142 = vmatprep.subr.bf16.mxu0 0
    %143 = vmatpush2.bf16.msra.mxu0 0
    %144 = vmatprep.subr.bf16.mxu0 0
    %145 = vmatpush2.bf16.msra.mxu0 0
    %146 = vmatprep.subr.bf16.mxu0 0
    %147 = vmatpush2.bf16.msra.mxu0 0
    %148 = vmatprep.subr.bf16.mxu0 0
    %149 = vmatpush2.bf16.msra.mxu0 0
    %150 = vmatprep.subr.bf16.mxu0 0
    %151 = vmatpush2.bf16.msra.mxu0 0
    %152 = vmatprep.subr.bf16.mxu0 0
    %153 = vmatpush2.bf16.msra.mxu0 0
    %154 = vmatprep.subr.bf16.mxu0 0
    %155 = vmatpush2.bf16.msra.mxu0 0
    %156 = vmatprep.subr.bf16.mxu0 0
    %157 = vmatpush2.bf16.msra.mxu0 0
    %158 = vmatprep.mubr.bf16.mxu0 0
    %159 = vmatmul.mubr.bf16.gmra.mxu0 %v124
    %v160 = vpop.f32.mrf.mxu0
    %v161 = vadd.f32 %v96, %v160
    %v162 = vpop.f32.mrf.mxu0
    %v163 = vpop.f32.mrf.mxu0
    %v164 = vpop.f32.mrf.mxu0
    %165 = vdwg.mxu0
    %v166 = vxor.u32 %v161, 2147483648
    %v167 = vmul.f32 %v166, 1.442695
    %v168 = vpow.pop %v167
    %v169 = vadd.f32 %v168, 1.0
    %v170 = vrcp.pop %v169
    %v171 = vmul.f32 1.0, %v170
    %v172 = vpack.c.bf16 %v171, %v171
    %v173 = vld [vmem:[#allocation7] sm:$0xf]
    %v174 = vld [vmem:[#allocation7 + $0x4] sm:$0xf]
    %v175 = vld [vmem:[#allocation7 + $0x8] sm:$0xf]
    %v176 = vld [vmem:[#allocation7 + $0xc] sm:$0xf]
    %v177 = vld [vmem:[#allocation7 + $0x10] sm:$0xf]
    %v178 = vld [vmem:[#allocation7 + $0x14] sm:$0xf]
    %v179 = vld [vmem:[#allocation7 + $0x18] sm:$0xf]
    %v180 = vld [vmem:[#allocation7 + $0x1c] sm:$0xf]
    %v181 = vld [vmem:[#allocation7 + $0x20] sm:$0xf]
    %v182 = vld [vmem:[#allocation7 + $0x24] sm:$0xf]
    %v183 = vld [vmem:[#allocation7 + $0x28] sm:$0xf]
    %v184 = vld [vmem:[#allocation7 + $0x2c] sm:$0xf]
    %v185 = vld [vmem:[#allocation7 + $0x30] sm:$0xf]
    %v186 = vld [vmem:[#allocation7 + $0x34] sm:$0xf]
    %v187 = vld [vmem:[#allocation7 + $0x38] sm:$0xf]
    %v188 = vld [vmem:[#allocation7 + $0x3c] sm:$0xf]
    %v189 = vld [vmem:[%s4] sm:$0x1]
    %v191 = vlaneseq
    %v192 = vshrl.u32 %v191, 7
    %v193 = vsub.s32 0, %v192
    %v194 = vrot.slane %v189, %v193
    %v212 = vunpack.c.l.b16 %v173
    %v213 = vunpack.c.l.b16 %v174
    %v214 = vunpack.c.l.b16 %v175
    %v215 = vunpack.c.l.b16 %v176
    %v216 = vunpack.c.l.b16 %v177
    %v217 = vunpack.c.l.b16 %v178
    %v218 = vunpack.c.l.b16 %v179
    %v219 = vunpack.c.l.b16 %v180
    %v220 = vunpack.c.l.b16 %v181
    %v221 = vunpack.c.l.b16 %v182
    %v222 = vunpack.c.l.b16 %v183
    %v223 = vunpack.c.l.b16 %v184
    %v224 = vunpack.c.l.b16 %v185
    %v225 = vunpack.c.l.b16 %v186
    %v226 = vunpack.c.l.b16 %v187
    %v227 = vunpack.c.l.b16 %v188
    %v228 = vpack.c.b16 %v213, %v212
    %v229 = vpack.c.b16 %v215, %v214
    %v230 = vpack.c.b16 %v217, %v216
    %v231 = vpack.c.b16 %v219, %v218
    %v232 = vpack.c.b16 %v221, %v220
    %v233 = vpack.c.b16 %v223, %v222
    %v234 = vpack.c.b16 %v225, %v224
    %v235 = vpack.c.b16 %v227, %v226
    %244 = vmatprep.subr.bf16.mxu0 0
    %245 = vmatpush1.bf16.msra.mxu0 %v235
    %246 = vmatprep.subr.bf16.mxu0 0
    %247 = vmatpush1.bf16.msra.mxu0 %v234
    %248 = vmatprep.subr.bf16.mxu0 0
    %249 = vmatpush1.bf16.msra.mxu0 %v233
    %250 = vmatprep.subr.bf16.mxu0 0
    %251 = vmatpush1.bf16.msra.mxu0 %v232
    %252 = vmatprep.subr.bf16.mxu0 0
    %253 = vmatpush1.bf16.msra.mxu0 %v231
    %254 = vmatprep.subr.bf16.mxu0 0
    %255 = vmatpush1.bf16.msra.mxu0 %v230
    %256 = vmatprep.subr.bf16.mxu0 0
    %257 = vmatpush1.bf16.msra.mxu0 %v229
    %258 = vmatprep.subr.bf16.mxu0 0
    %259 = vmatpush1.bf16.msra.mxu0 %v228
    %260 = vmatprep.subr.bf16.mxu0 0
    %261 = vmatpush2.bf16.msra.mxu0 0
    %262 = vmatprep.subr.bf16.mxu0 0
    %263 = vmatpush2.bf16.msra.mxu0 0
    %264 = vmatprep.subr.bf16.mxu0 0
    %265 = vmatpush2.bf16.msra.mxu0 0
    %266 = vmatprep.subr.bf16.mxu0 0
    %267 = vmatpush2.bf16.msra.mxu0 0
    %268 = vmatprep.subr.bf16.mxu0 0
    %269 = vmatpush2.bf16.msra.mxu0 0
    %270 = vmatprep.subr.bf16.mxu0 0
    %271 = vmatpush2.bf16.msra.mxu0 0
    %272 = vmatprep.subr.bf16.mxu0 0
    %273 = vmatpush2.bf16.msra.mxu0 0
    %274 = vmatprep.subr.bf16.mxu0 0
    %275 = vmatpush2.bf16.msra.mxu0 0
    %276 = vmatprep.mubr.bf16.mxu0 0
    %277 = vmatmul.mubr.bf16.gmra.mxu0 %v172
    %v278 = vpop.f32.mrf.mxu0
    %v279 = vadd.f32 %v194, %v278
    %v280 = vpop.f32.mrf.mxu0
    %v281 = vpop.f32.mrf.mxu0
    %v282 = vpop.f32.mrf.mxu0
    %283 = vdwg.mxu0
    %v284 = vxor.u32 %v279, 2147483648
    %v285 = vmul.f32 %v284, 1.442695
    %v286 = vpow.pop %v285
    %v287 = vadd.f32 %v286, 1.0
    %v288 = vrcp.pop %v287
    %v289 = vmul.f32 1.0, %v288
    %v290 = vpack.c.bf16 %v289, %v289
    %v291 = vld [vmem:[#allocation8] sm:$0xf]
    %v292 = vld [vmem:[#allocation8 + $0x4] sm:$0xf]
    %v293 = vld [vmem:[#allocation8 + $0x8] sm:$0xf]
    %v294 = vld [vmem:[#allocation8 + $0xc] sm:$0xf]
    %v295 = vld [vmem:[#allocation8 + $0x10] sm:$0xf]
    %v296 = vld [vmem:[#allocation8 + $0x14] sm:$0xf]
    %v297 = vld [vmem:[#allocation8 + $0x18] sm:$0xf]
    %v298 = vld [vmem:[#allocation8 + $0x1c] sm:$0xf]
    %v299 = vld [vmem:[#allocation8 + $0x20] sm:$0xf]
    %v300 = vld [vmem:[#allocation8 + $0x24] sm:$0xf]
    %v301 = vld [vmem:[#allocation8 + $0x28] sm:$0xf]
    %v302 = vld [vmem:[#allocation8 + $0x2c] sm:$0xf]
    %v303 = vld [vmem:[#allocation8 + $0x30] sm:$0xf]
    %v304 = vld [vmem:[#allocation8 + $0x34] sm:$0xf]
    %v305 = vld [vmem:[#allocation8 + $0x38] sm:$0xf]
    %v306 = vld [vmem:[#allocation8 + $0x3c] sm:$0xf]
    %v307 = vld [vmem:[%s6] sm:$0x1]
    %v309 = vlaneseq
    %v310 = vshrl.u32 %v309, 7
    %v311 = vsub.s32 0, %v310
    %v312 = vrot.slane %v307, %v311
    %v330 = vunpack.c.l.b16 %v291
    %v331 = vunpack.c.l.b16 %v292
    %v332 = vunpack.c.l.b16 %v293
    %v333 = vunpack.c.l.b16 %v294
    %v334 = vunpack.c.l.b16 %v295
    %v335 = vunpack.c.l.b16 %v296
    %v336 = vunpack.c.l.b16 %v297
    %v337 = vunpack.c.l.b16 %v298
    %v338 = vunpack.c.l.b16 %v299
    %v339 = vunpack.c.l.b16 %v300
    %v340 = vunpack.c.l.b16 %v301
    %v341 = vunpack.c.l.b16 %v302
    %v342 = vunpack.c.l.b16 %v303
    %v343 = vunpack.c.l.b16 %v304
    %v344 = vunpack.c.l.b16 %v305
    %v345 = vunpack.c.l.b16 %v306
    %v346 = vpack.c.b16 %v331, %v330
    %v347 = vpack.c.b16 %v333, %v332
    %v348 = vpack.c.b16 %v335, %v334
    %v349 = vpack.c.b16 %v337, %v336
    %v350 = vpack.c.b16 %v339, %v338
    %v351 = vpack.c.b16 %v341, %v340
    %v352 = vpack.c.b16 %v343, %v342
    %v353 = vpack.c.b16 %v345, %v344
    %362 = vmatprep.subr.bf16.mxu0 0
    %363 = vmatpush1.bf16.msra.mxu0 %v353
    %364 = vmatprep.subr.bf16.mxu0 0
    %365 = vmatpush1.bf16.msra.mxu0 %v352
    %366 = vmatprep.subr.bf16.mxu0 0
    %367 = vmatpush1.bf16.msra.mxu0 %v351
    %368 = vmatprep.subr.bf16.mxu0 0
    %369 = vmatpush1.bf16.msra.mxu0 %v350
    %370 = vmatprep.subr.bf16.mxu0 0
    %371 = vmatpush1.bf16.msra.mxu0 %v349
    %372 = vmatprep.subr.bf16.mxu0 0
    %373 = vmatpush1.bf16.msra.mxu0 %v348
    %374 = vmatprep.subr.bf16.mxu0 0
    %375 = vmatpush1.bf16.msra.mxu0 %v347
    %376 = vmatprep.subr.bf16.mxu0 0
    %377 = vmatpush1.bf16.msra.mxu0 %v346
    %378 = vmatprep.subr.bf16.mxu0 0
    %379 = vmatpush2.bf16.msra.mxu0 0
    %380 = vmatprep.subr.bf16.mxu0 0
    %381 = vmatpush2.bf16.msra.mxu0 0
    %382 = vmatprep.subr.bf16.mxu0 0
    %383 = vmatpush2.bf16.msra.mxu0 0
    %384 = vmatprep.subr.bf16.mxu0 0
    %385 = vmatpush2.bf16.msra.mxu0 0
    %386 = vmatprep.subr.bf16.mxu0 0
    %387 = vmatpush2.bf16.msra.mxu0 0
    %388 = vmatprep.subr.bf16.mxu0 0
    %389 = vmatpush2.bf16.msra.mxu0 0
    %390 = vmatprep.subr.bf16.mxu0 0
    %391 = vmatpush2.bf16.msra.mxu0 0
    %392 = vmatprep.subr.bf16.mxu0 0
    %393 = vmatpush2.bf16.msra.mxu0 0
    %394 = vmatprep.mubr.bf16.mxu0 0
    %395 = vmatmul.mubr.bf16.gmra.mxu0 %v290
    %v396 = vpop.f32.mrf.mxu0
    %v397 = vadd.f32 %v312, %v396
    %v398 = vpop.f32.mrf.mxu0
    %v399 = vpop.f32.mrf.mxu0
    %v400 = vpop.f32.mrf.mxu0
    %401 = vdwg.mxu0
    %v402 = vpack.c.bf16 %v397, %v397
    %403 = vst [vmem:[#allocation10] sm:$0xf] %v402
    // Predicated region
    $region46: #{tpu_custom_call.1} parent=1 // pred_check
      _
    $region47: #{tpu_custom_call.1} parent=1 // pred_check_branch
      %405 = sbr.rel (0) target = $region49
    $region48: #{tpu_custom_call.1} parent=1 // pred_region
      %s407 = ssub.s32 64, 64
      %408 = vsyncadd [#allocation4], %s407
      %s410 = sshll.u32 [#allocation10], 4
      %s411 = int_to_ptr.vmem [resolvable:$true] %s410
      %413 = dma.vmem_to_hbm [thread:$0]  %s411, 64, %s7, [#allocation4]
    $region49: #{tpu_custom_call.1} parent=1 // pred_fallthru
      _
    // Predicated region
    $region50: #{tpu_custom_call.1} parent=1 // pred_check
      _
    $region51: #{tpu_custom_call.1} parent=1 // pred_check_branch
      %415 = sbr.rel (0) target = $region53
    $region52: #{tpu_custom_call.1} parent=1 // pred_region
      %416 = dma.done [#allocation4], 64
    $region53: #{tpu_custom_call.1} parent=1 // pred_fallthru
      _
    %417 = vsyncpa [#allocation3], 1
    %418 = vsyncpa [#allocation6], 1
    %419 = vsyncpa [#allocation9], 1
    %420 = vsyncpa [#allocation4], 1

</llo_original>
